<compile_context>
chip_gen: v5e
topology: v5e:2x2
jax: 0.10.0
libtpu: 0.0.40
codegen_flags: <defaults>
</compile_context>

<pallas_src>
import jax
import jax.numpy as jnp
from jax.experimental import pallas as pl
from jax.experimental.pallas import tpu as pltpu

NO_PAD = 8        # head output (mean, log-var) padded 2 -> 8 lanes
SUB_TILE = 256    # in-kernel row-chunk size for large batch tiles


def mlp_kernel(x_ref, w1_ref, b1_ref, w2_ref, b2_ref, w3_ref, b3_ref, o_ref):
    tb = x_ref.shape[0]
    rows = tb if tb <= SUB_TILE else SUB_TILE      # wrapper guarantees tb % 256 == 0 if tb > 256
    n_chunks = tb // rows

    # Weight/bias blocks are grid-invariant; hoist their loads out of the chunk loop.
    w1, b1 = w1_ref[...], b1_ref[...]
    w2, b2 = w2_ref[...], b2_ref[...]
    w3, b3 = w3_ref[...], b3_ref[...]

    def one_chunk(r0):
        # Layer 1: Linear + ReLU.  (Dropout before this layer is identity at eval time.)
        # TODO(synk): training-mode dropout (nn.Dropout) is not implemented.
        x = x_ref[pl.ds(r0, rows), :].astype(w1.dtype)       # f32 -> bf16 in-kernel
        h = jnp.dot(x, w1, preferred_element_type=jnp.float32)
        h = jnp.maximum(h + b1, 0.0)                          # f32 epilogue
        # Layer 2: Linear + ReLU.
        h = jnp.dot(h.astype(w2.dtype), w2, preferred_element_type=jnp.float32)
        h = jnp.maximum(h + b2, 0.0)
        # Head: Linear -> 8 padded lanes; exp() is applied to column 1 only.
        y = jnp.dot(h.astype(w3.dtype), w3, preferred_element_type=jnp.float32) + b3
        col1 = jax.lax.broadcasted_iota(jnp.int32, y.shape, 1) == 1
        o_ref[pl.ds(r0, rows), :] = jnp.where(col1, jnp.exp(y), y)

    if n_chunks == 1:
        one_chunk(0)
    else:
        def body(c, carry):
            one_chunk(pl.multiple_of(c * rows, rows))
            return carry
        jax.lax.fori_loop(0, n_chunks, body, 0, unroll=True)


def _round_up(n, m):
    return (n + m - 1) // m * m


def _choose_batch_tile(B, tile_b):
    """Batch tile: >=2 grid steps whenever B >= 16 (v7x megacore, harmless on
    v5e/v6e); large batches get 256-row-multiple tiles (amortize the ~0.35us
    per-grid-step overhead, sub-tiled to 256 rows inside the kernel)."""
    b8 = _round_up(B, 8)
    if b8 < 16:
        return b8
    if b8 <= 2 * SUB_TILE:
        return _round_up(pl.cdiv(b8, 2), 8)
    return min(_round_up(tile_b, SUB_TILE), _round_up(pl.cdiv(b8, 2), SUB_TILE))


def prepare_params(params, compute_dtype=jnp.bfloat16):
    """One-time: pad hidden dims to multiples of 128, head to 8 lanes; cast
    weights to bf16 (f32 MXU accumulation), keep biases f32.  Called OUTSIDE
    the per-call forward so no pad/cast HBM passes happen at inference time."""
    w1, b1 = params["w1"], params["b1"]        # (F, H1), (1, H1)
    w2, b2 = params["w2"], params["b2"]        # (H1, H2), (1, H2)
    w3, b3 = params["w3"], params["b3"]        # (H2, 2), (1, 2)
    H1, H2 = w1.shape[1], w2.shape[1]
    H1p, H2p = _round_up(H1, 128), _round_up(H2, 128)

    pad2 = lambda a, r, c: jnp.pad(a, ((0, r - a.shape[0]), (0, c - a.shape[1])))
    return dict(
        w1=pad2(w1, w1.shape[0], H1p).astype(compute_dtype),
        b1=pad2(b1, 1, H1p).astype(jnp.float32),
        w2=pad2(w2, H1p, H2p).astype(compute_dtype),
        b2=pad2(b2, 1, H2p).astype(jnp.float32),
        w3=pad2(w3, H2p, NO_PAD).astype(compute_dtype),
        b3=pad2(b3, 1, NO_PAD).astype(jnp.float32),
    )


def inner_model_forward(x, prepped, *, tile_b=1024):
    """x: (B, F) float32.  prepped: dict from prepare_params()."""
    B, F = x.shape
    w1, b1 = prepped["w1"], prepped["b1"]
    w2, b2 = prepped["w2"], prepped["b2"]
    w3, b3 = prepped["w3"], prepped["b3"]
    H1p, H2p = w1.shape[1], w2.shape[1]

    tb = _choose_batch_tile(B, tile_b)
    assert tb <= SUB_TILE or tb % SUB_TILE == 0
    B_pad = _round_up(B, tb)
    xp = x if B_pad == B else jnp.pad(x, ((0, B_pad - B), (0, 0)))   # batch pad only

    grid = (B_pad // tb,)
    const = lambda shape: pl.BlockSpec(shape, lambda i: (0, 0))      # grid-invariant block

    out = pl.pallas_call(
        mlp_kernel,
        out_shape=jax.ShapeDtypeStruct((B_pad, NO_PAD), jnp.float32),
        grid_spec=pltpu.PrefetchScalarGridSpec(
            num_scalar_prefetch=0,
            grid=grid,
            in_specs=[
                pl.BlockSpec((tb, F), lambda i: (i, 0)),   # x: unpadded lanes, f32
                const((F, H1p)), const((1, H1p)),
                const((H1p, H2p)), const((1, H2p)),
                const((H2p, NO_PAD)), const((1, NO_PAD)),
            ],
            out_specs=pl.BlockSpec((tb, NO_PAD), lambda i: (i, 0)),
        ),
        compiler_params=pltpu.CompilerParams(
            dimension_semantics=("parallel",)),
    )(xp, w1, b1, w2, b2, w3, b3)

    # Drop batch padding and the 6 zero-padded head lanes: (B, 2) = [mean, exp(log_var)].
    return out[:B, :2]


def init_params(key, n_features, n_units_per_layer):
    """PyTorch-style uniform(-1/sqrt(fan_in), 1/sqrt(fan_in)) init, deterministic.
    Weights are stored transposed to (in, out) layout for the kernel."""
    dims = [n_features] + list(n_units_per_layer) + [2]
    params = {}
    for idx in range(3):
        fan_in, fan_out = dims[idx], dims[idx + 1]
        key, kw, kb = jax.random.split(key, 3)
        bound = 1.0 / (fan_in ** 0.5)
        params[f"w{idx + 1}"] = jax.random.uniform(
            kw, (fan_in, fan_out), jnp.float32, -bound, bound)
        params[f"b{idx + 1}"] = jax.random.uniform(
            kb, (1, fan_out), jnp.float32, -bound, bound)
    return params


def reference_forward(x, params):
    h = jnp.maximum(x @ params["w1"] + params["b1"], 0.0)
    h = jnp.maximum(h @ params["w2"] + params["b2"], 0.0)
    y = h @ params["w3"] + params["b3"]
    return jnp.concatenate([y[:, 0:1], jnp.exp(y[:, 1:2])], axis=1)


if __name__ == "__main__":
    key = jax.random.PRNGKey(0)
    B, F = 64, 32
    n_units_per_layer = [64, 32]

    kx, kp = jax.random.split(key)
    x = jax.random.normal(kx, (B, F), jnp.float32)
    raw_params = init_params(kp, F, n_units_per_layer)
    prepped = prepare_params(raw_params)      # one-time pad + bf16 cast, outside jit

    fwd = jax.jit(inner_model_forward)

    # Full batch (grid of 2 steps -> both v7x TensorCores get work).
    out = jax.block_until_ready(fwd(x, prepped))
    ref = reference_forward(x, raw_params)
    assert out.shape == (B, 2)
    # bf16 matmul operands (f32 accumulation) vs f32 reference -> loose tol.
    assert jnp.allclose(out, ref, atol=2e-2, rtol=2e-2), \
        float(jnp.max(jnp.abs(out - ref)))

    # Ragged batch (exercises batch zero-padding + 2-step grid path).
    xr = x[:50]
    out_r = jax.block_until_ready(fwd(xr, prepped))
    ref_r = reference_forward(xr, raw_params)
    assert out_r.shape == (50, 2)
    assert jnp.allclose(out_r, ref_r, atol=2e-2, rtol=2e-2), \
        float(jnp.max(jnp.abs(out_r - ref_r)))

    print("KERNEL_OK")
</pallas_src>

<mosaic_0001>
module attributes {stable_mosaic.version = 11 : i64} {
  func.func @mlp_kernel(%arg0: i32, %arg1: memref<32x32xf32, #tpu.memory_space<vmem>>, %arg2: memref<32x128xbf16, #tpu.memory_space<vmem>>, %arg3: memref<1x128xf32, #tpu.memory_space<vmem>>, %arg4: memref<128x128xbf16, #tpu.memory_space<vmem>>, %arg5: memref<1x128xf32, #tpu.memory_space<vmem>>, %arg6: memref<128x8xbf16, #tpu.memory_space<vmem>>, %arg7: memref<1x8xf32, #tpu.memory_space<vmem>>, %arg8: memref<32x8xf32, #tpu.memory_space<vmem>>) attributes {dimension_semantics = [#tpu.dimension_semantics<parallel>], iteration_bounds = array<i64: 2>, scalar_prefetch = 0 : i64, scratch_operands = 0 : i64, tpu.core_type = #tpu.core_type<tc>, window_params = [{transform_indices = @transform_0, window_bounds = array<i64: 32, 32>}, {pipeline_mode = #tpu.pipeline_mode<synchronous>, transform_indices = @transform_1, window_bounds = array<i64: 32, 128>}, {pipeline_mode = #tpu.pipeline_mode<synchronous>, transform_indices = @transform_2, window_bounds = array<i64: 1, 128>}, {pipeline_mode = #tpu.pipeline_mode<synchronous>, transform_indices = @transform_3, window_bounds = array<i64: 128, 128>}, {pipeline_mode = #tpu.pipeline_mode<synchronous>, transform_indices = @transform_4, window_bounds = array<i64: 1, 128>}, {pipeline_mode = #tpu.pipeline_mode<synchronous>, transform_indices = @transform_5, window_bounds = array<i64: 128, 8>}, {pipeline_mode = #tpu.pipeline_mode<synchronous>, transform_indices = @transform_6, window_bounds = array<i64: 1, 8>}, {transform_indices = @transform_7, window_bounds = array<i64: 32, 8>}]} {
    %c0 = arith.constant 0 : index
    %c0_0 = arith.constant 0 : index
    %0 = vector.load %arg2[%c0, %c0_0] : memref<32x128xbf16, #tpu.memory_space<vmem>>, vector<32x128xbf16>
    %c0_1 = arith.constant 0 : index
    %c0_2 = arith.constant 0 : index
    %1 = vector.load %arg3[%c0_1, %c0_2] : memref<1x128xf32, #tpu.memory_space<vmem>>, vector<1x128xf32>
    %c0_3 = arith.constant 0 : index
    %c0_4 = arith.constant 0 : index
    %2 = vector.load %arg4[%c0_3, %c0_4] : memref<128x128xbf16, #tpu.memory_space<vmem>>, vector<128x128xbf16>
    %c0_5 = arith.constant 0 : index
    %c0_6 = arith.constant 0 : index
    %3 = vector.load %arg5[%c0_5, %c0_6] : memref<1x128xf32, #tpu.memory_space<vmem>>, vector<1x128xf32>
    %c0_7 = arith.constant 0 : index
    %c0_8 = arith.constant 0 : index
    %4 = vector.load %arg6[%c0_7, %c0_8] : memref<128x8xbf16, #tpu.memory_space<vmem>>, vector<128x8xbf16>
    %c0_9 = arith.constant 0 : index
    %c0_10 = arith.constant 0 : index
    %5 = vector.load %arg7[%c0_9, %c0_10] : memref<1x8xf32, #tpu.memory_space<vmem>>, vector<1x8xf32>
    %c0_11 = arith.constant 0 : index
    %c0_12 = arith.constant 0 : index
    %6 = vector.load %arg1[%c0_11, %c0_12] : memref<32x32xf32, #tpu.memory_space<vmem>>, vector<32x32xf32>
    %7 = arith.truncf %6 : vector<32x32xf32> to vector<32x32xbf16>
    %cst = arith.constant dense<0.000000e+00> : vector<32x128xf32>
    %8 = tpu.matmul %7, %0, %cst {dimension_numbers = #tpu.dot_dimension_numbers<[1], [0], [0], [1], [0, 0, 1, 1], [], []>} : vector<32x32xbf16>, vector<32x128xbf16>, vector<32x128xf32> -> vector<32x128xf32>
    %9 = vector.broadcast %1 : vector<1x128xf32> to vector<32x128xf32>
    %10 = arith.addf %8, %9 : vector<32x128xf32>
    %cst_13 = arith.constant 0.000000e+00 : f32
    %11 = vector.broadcast %cst_13 : f32 to vector<32x128xf32>
    %12 = arith.maximumf %10, %11 : vector<32x128xf32>
    %13 = arith.truncf %12 : vector<32x128xf32> to vector<32x128xbf16>
    %cst_14 = arith.constant dense<0.000000e+00> : vector<32x128xf32>
    %14 = tpu.matmul %13, %2, %cst_14 {dimension_numbers = #tpu.dot_dimension_numbers<[1], [0], [0], [1], [0, 0, 1, 1], [], []>} : vector<32x128xbf16>, vector<128x128xbf16>, vector<32x128xf32> -> vector<32x128xf32>
    %15 = vector.broadcast %3 : vector<1x128xf32> to vector<32x128xf32>
    %16 = arith.addf %14, %15 : vector<32x128xf32>
    %cst_15 = arith.constant 0.000000e+00 : f32
    %17 = vector.broadcast %cst_15 : f32 to vector<32x128xf32>
    %18 = arith.maximumf %16, %17 : vector<32x128xf32>
    %19 = arith.truncf %18 : vector<32x128xf32> to vector<32x128xbf16>
    %cst_16 = arith.constant dense<0.000000e+00> : vector<32x8xf32>
    %20 = tpu.matmul %19, %4, %cst_16 {dimension_numbers = #tpu.dot_dimension_numbers<[1], [0], [0], [1], [0, 0, 1, 1], [], []>} : vector<32x128xbf16>, vector<128x8xbf16>, vector<32x8xf32> -> vector<32x8xf32>
    %21 = vector.broadcast %5 : vector<1x8xf32> to vector<32x8xf32>
    %22 = arith.addf %20, %21 : vector<32x8xf32>
    %23 = tpu.iota {dimensions = array<i32: 1>} : vector<32x8xi32>
    %c1_i32 = arith.constant 1 : i32
    %24 = vector.broadcast %c1_i32 : i32 to vector<32x8xi32>
    %25 = arith.cmpi eq, %23, %24 : vector<32x8xi32>
    %26 = math.exp %22 : vector<32x8xf32>
    %27 = arith.select %25, %26, %22 : vector<32x8xi1>, vector<32x8xf32>
    %c0_17 = arith.constant 0 : index
    %c0_18 = arith.constant 0 : index
    %28 = vector.load %arg8[%c0_17, %c0_18] : memref<32x8xf32, #tpu.memory_space<vmem>>, vector<32x8xf32>
    tpu.vector_store %arg8[%c0_17, %c0_18], %27 {strides = array<i32>} : memref<32x8xf32, #tpu.memory_space<vmem>>, vector<32x8xf32>,
    return
  }
  func.func @transform_0(%arg0: i32) -> (i32, i32) {
    %c0_i32 = arith.constant 0 : i32
    %c0_i32_0 = arith.constant 0 : i32
    return %arg0, %c0_i32 : i32, i32
  }
  func.func @transform_1(%arg0: i32) -> (i32, i32) {
    %c0_i32 = arith.constant 0 : i32
    %c0_i32_0 = arith.constant 0 : i32
    %c0_i32_1 = arith.constant 0 : i32
    return %c0_i32, %c0_i32_0 : i32, i32
  }
  func.func @transform_2(%arg0: i32) -> (i32, i32) {
    %c0_i32 = arith.constant 0 : i32
    %c0_i32_0 = arith.constant 0 : i32
    %c0_i32_1 = arith.constant 0 : i32
    return %c0_i32, %c0_i32_0 : i32, i32
  }
  func.func @transform_3(%arg0: i32) -> (i32, i32) {
    %c0_i32 = arith.constant 0 : i32
    %c0_i32_0 = arith.constant 0 : i32
    %c0_i32_1 = arith.constant 0 : i32
    return %c0_i32, %c0_i32_0 : i32, i32
  }
  func.func @transform_4(%arg0: i32) -> (i32, i32) {
    %c0_i32 = arith.constant 0 : i32
    %c0_i32_0 = arith.constant 0 : i32
    %c0_i32_1 = arith.constant 0 : i32
    return %c0_i32, %c0_i32_0 : i32, i32
  }
  func.func @transform_5(%arg0: i32) -> (i32, i32) {
    %c0_i32 = arith.constant 0 : i32
    %c0_i32_0 = arith.constant 0 : i32
    %c0_i32_1 = arith.constant 0 : i32
    return %c0_i32, %c0_i32_0 : i32, i32
  }
  func.func @transform_6(%arg0: i32) -> (i32, i32) {
    %c0_i32 = arith.constant 0 : i32
    %c0_i32_0 = arith.constant 0 : i32
    %c0_i32_1 = arith.constant 0 : i32
    return %c0_i32, %c0_i32_0 : i32, i32
  }
  func.func @transform_7(%arg0: i32) -> (i32, i32) {
    %c0_i32 = arith.constant 0 : i32
    %c0_i32_0 = arith.constant 0 : i32
    return %arg0, %c0_i32 : i32, i32
  }
}

</mosaic_0001>

<llo_original>
// kernel: inner_model_forward.1
$region0: #{inner_model_forward.1}
  #allocation0 [shape = 'u32[]', space=smem, size = 0x4, offset = 0x4, fixed_abs, tag = 'smem constant byte address 0x4 - core index']
  #allocation1 [shape = 'u32[72,128]{1,0:T(1,128)}', space=vmem, size = 0x9000, scoped, tag = 'internal scratch']
  %s0 = inlined_call_operand.vmem [shape: f32[64,32], index: 0, kind: input, shape index: {}]
  %s1 = inlined_call_operand.vmem [shape: bf16[32,128], index: 1, kind: input, shape index: {}]
  %s2 = inlined_call_operand.vmem [shape: f32[1,128], index: 2, kind: input, shape index: {}]
  %s3 = inlined_call_operand.vmem [shape: bf16[128,128], index: 3, kind: input, shape index: {}]
  %s4 = inlined_call_operand.vmem [shape: f32[1,128], index: 4, kind: input, shape index: {}]
  %s5 = inlined_call_operand.vmem [shape: bf16[128,8], index: 5, kind: input, shape index: {}]
  %s6 = inlined_call_operand.vmem [shape: f32[1,8], index: 6, kind: input, shape index: {}]
  %s7 = inlined_call_operand.vmem [shape: f32[64,8], index: 7, kind: output, shape index: {}]
  %s8 = sld [smem:[#allocation0]]
  $region61: #{inner_model_forward.1} parent=0
    _
  %s10 = ssub.s32 1, %s8
  %s11 = scalar_select 0, %s10, %s8
  loop: start=0, step=1, limit=4
  $region2: #{inner_model_forward.1} parent=0 // loop_pre_header
    _
  $region3: #{inner_model_forward.1} parent=0 // loop_header
    %s13 = sphi 0, %s17
    %p14 = scmp.ge.s32.totalorder %s13, 4
    %s23 = sphi 0, %s25
    %s26 = sphi 0, %s23
    %s27 = sphi 0, %s26
    %s43 = sphi 0, %s27
    %s47 = sphi 0, %s47
    %s49 = sphi 0, %s47
    %s50 = sphi 0, %s49
    %s64 = sphi 0, %s50
    %s68 = sphi 0, %s68
    %s70 = sphi 0, %s68
    %s71 = sphi 0, %s70
    %s85 = sphi 0, %s71
    %s89 = sphi 0, %s89
    %s91 = sphi 0, %s89
    %s92 = sphi 0, %s91
    %s106 = sphi 0, %s92
    %s110 = sphi 0, %s110
    %s112 = sphi 0, %s110
    %s113 = sphi 0, %s112
    %s127 = sphi 0, %s113
    %s131 = sphi 0, %s131
    %s133 = sphi 0, %s131
    %s134 = sphi 0, %s133
    %s148 = sphi 0, %s134
    %s152 = sphi 0, %s152
    %s154 = sphi 0, %s152
    %s155 = sphi 0, %s154
    %s169 = sphi 0, %s155
    %s175 = sphi 0, %s177
    %s178 = sphi 0, %s175
    %s179 = sphi 0, %s178
    %s195 = sphi 0, %s179
  $region4: #{inner_model_forward.1} parent=0 // loop_header_branch
    %16 = sbr.rel (%p14) target = $region8
  $region5: #{inner_model_forward.1} parent=0 // loop_body
    %s18 = ssub.s32 %s13, 1
    %s19 = ssub.s32 %s13, 2
    %s20 = sadd.s32 %s13, 1
    %s21 = ssub.s32 %s13, %s20
    %p22 = scmp.eq.s32.totalorder %s21, 0
    %s24 = sadd.s32 %s23, 1
    %s25 = scalar_select %p22, %s23, %s24
    %p28 = pneg %p22
    %p29 = scmp.eq.s32.totalorder %s13, 1
    %p30 = por %p28, %p29
    %p31 = scmp.ne.s32.totalorder %s23, %s26
    %p32 = scmp.eq.s32.totalorder %s13, 0
    %p33 = por %p31, %p32
    %p34 = scmp.ne.s32.totalorder %s23, %s26
    %p35 = scmp.eq.s32.totalorder %s18, 1
    %p36 = por %p34, %p35
    %p37 = scmp.ne.s32.totalorder %s26, %s27
    %p38 = scmp.eq.s32.totalorder %s18, 0
    %p39 = por %p37, %p38
    %p40 = scmp.ne.s32.totalorder %s26, %s27
    %p41 = scmp.eq.s32.totalorder %s19, 1
    %p42 = por %p40, %p41
    %p44 = scmp.ne.s32.totalorder %s27, %s43
    %p45 = scmp.eq.s32.totalorder %s19, 0
    %p46 = por %p44, %p45
    %s48 = sadd.s32 %s47, 1
    %p51 = scmp.eq.s32.totalorder %s13, 1
    %p52 = scmp.ne.s32.totalorder %s47, %s49
    %p53 = scmp.eq.s32.totalorder %s13, 0
    %p54 = por %p52, %p53
    %p55 = scmp.ne.s32.totalorder %s47, %s49
    %p56 = scmp.eq.s32.totalorder %s18, 1
    %p57 = por %p55, %p56
    %p58 = scmp.ne.s32.totalorder %s49, %s50
    %p59 = scmp.eq.s32.totalorder %s18, 0
    %p60 = por %p58, %p59
    %p61 = scmp.ne.s32.totalorder %s49, %s50
    %p62 = scmp.eq.s32.totalorder %s19, 1
    %p63 = por %p61, %p62
    %p65 = scmp.ne.s32.totalorder %s50, %s64
    %p66 = scmp.eq.s32.totalorder %s19, 0
    %p67 = por %p65, %p66
    %s69 = sadd.s32 %s68, 1
    %p72 = scmp.eq.s32.totalorder %s13, 1
    %p73 = scmp.ne.s32.totalorder %s68, %s70
    %p74 = scmp.eq.s32.totalorder %s13, 0
    %p75 = por %p73, %p74
    %p76 = scmp.ne.s32.totalorder %s68, %s70
    %p77 = scmp.eq.s32.totalorder %s18, 1
    %p78 = por %p76, %p77
    %p79 = scmp.ne.s32.totalorder %s70, %s71
    %p80 = scmp.eq.s32.totalorder %s18, 0
    %p81 = por %p79, %p80
    %p82 = scmp.ne.s32.totalorder %s70, %s71
    %p83 = scmp.eq.s32.totalorder %s19, 1
    %p84 = por %p82, %p83
    %p86 = scmp.ne.s32.totalorder %s71, %s85
    %p87 = scmp.eq.s32.totalorder %s19, 0
    %p88 = por %p86, %p87
    %s90 = sadd.s32 %s89, 1
    %p93 = scmp.eq.s32.totalorder %s13, 1
    %p94 = scmp.ne.s32.totalorder %s89, %s91
    %p95 = scmp.eq.s32.totalorder %s13, 0
    %p96 = por %p94, %p95
    %p97 = scmp.ne.s32.totalorder %s89, %s91
    %p98 = scmp.eq.s32.totalorder %s18, 1
    %p99 = por %p97, %p98
    %p100 = scmp.ne.s32.totalorder %s91, %s92
    %p101 = scmp.eq.s32.totalorder %s18, 0
    %p102 = por %p100, %p101
    %p103 = scmp.ne.s32.totalorder %s91, %s92
    %p104 = scmp.eq.s32.totalorder %s19, 1
    %p105 = por %p103, %p104
    %p107 = scmp.ne.s32.totalorder %s92, %s106
    %p108 = scmp.eq.s32.totalorder %s19, 0
    %p109 = por %p107, %p108
    %s111 = sadd.s32 %s110, 1
    %p114 = scmp.eq.s32.totalorder %s13, 1
    %p115 = scmp.ne.s32.totalorder %s110, %s112
    %p116 = scmp.eq.s32.totalorder %s13, 0
    %p117 = por %p115, %p116
    %p118 = scmp.ne.s32.totalorder %s110, %s112
    %p119 = scmp.eq.s32.totalorder %s18, 1
    %p120 = por %p118, %p119
    %p121 = scmp.ne.s32.totalorder %s112, %s113
    %p122 = scmp.eq.s32.totalorder %s18, 0
    %p123 = por %p121, %p122
    %p124 = scmp.ne.s32.totalorder %s112, %s113
    %p125 = scmp.eq.s32.totalorder %s19, 1
    %p126 = por %p124, %p125
    %p128 = scmp.ne.s32.totalorder %s113, %s127
    %p129 = scmp.eq.s32.totalorder %s19, 0
    %p130 = por %p128, %p129
    %s132 = sadd.s32 %s131, 1
    %p135 = scmp.eq.s32.totalorder %s13, 1
    %p136 = scmp.ne.s32.totalorder %s131, %s133
    %p137 = scmp.eq.s32.totalorder %s13, 0
    %p138 = por %p136, %p137
    %p139 = scmp.ne.s32.totalorder %s131, %s133
    %p140 = scmp.eq.s32.totalorder %s18, 1
    %p141 = por %p139, %p140
    %p142 = scmp.ne.s32.totalorder %s133, %s134
    %p143 = scmp.eq.s32.totalorder %s18, 0
    %p144 = por %p142, %p143
    %p145 = scmp.ne.s32.totalorder %s133, %s134
    %p146 = scmp.eq.s32.totalorder %s19, 1
    %p147 = por %p145, %p146
    %p149 = scmp.ne.s32.totalorder %s134, %s148
    %p150 = scmp.eq.s32.totalorder %s19, 0
    %p151 = por %p149, %p150
    %s153 = sadd.s32 %s152, 1
    %p156 = scmp.eq.s32.totalorder %s13, 1
    %p157 = scmp.ne.s32.totalorder %s152, %s154
    %p158 = scmp.eq.s32.totalorder %s13, 0
    %p159 = por %p157, %p158
    %p160 = scmp.ne.s32.totalorder %s152, %s154
    %p161 = scmp.eq.s32.totalorder %s18, 1
    %p162 = por %p160, %p161
    %p163 = scmp.ne.s32.totalorder %s154, %s155
    %p164 = scmp.eq.s32.totalorder %s18, 0
    %p165 = por %p163, %p164
    %p166 = scmp.ne.s32.totalorder %s154, %s155
    %p167 = scmp.eq.s32.totalorder %s19, 1
    %p168 = por %p166, %p167
    %p170 = scmp.ne.s32.totalorder %s155, %s169
    %p171 = scmp.eq.s32.totalorder %s19, 0
    %p172 = por %p170, %p171
    %s173 = ssub.s32 %s13, %s20
    %p174 = scmp.eq.s32.totalorder %s173, 0
    %s176 = sadd.s32 %s175, 1
    %s177 = scalar_select %p174, %s175, %s176
    %p180 = pneg %p174
    %p181 = scmp.eq.s32.totalorder %s13, 1
    %p182 = por %p180, %p181
    %p183 = scmp.ne.s32.totalorder %s175, %s178
    %p184 = scmp.eq.s32.totalorder %s13, 0
    %p185 = por %p183, %p184
    %p186 = scmp.ne.s32.totalorder %s175, %s178
    %p187 = scmp.eq.s32.totalorder %s18, 1
    %p188 = por %p186, %p187
    %p189 = scmp.ne.s32.totalorder %s178, %s179
    %p190 = scmp.eq.s32.totalorder %s18, 0
    %p191 = por %p189, %p190
    %p192 = scmp.ne.s32.totalorder %s178, %s179
    %p193 = scmp.eq.s32.totalorder %s19, 1
    %p194 = por %p192, %p193
    %p196 = scmp.ne.s32.totalorder %s179, %s195
    %p197 = scmp.eq.s32.totalorder %s19, 0
    %p198 = por %p196, %p197
    %p199 = scmp.le.s32.totalorder 1, %s13
    %p200 = scmp.lt.s32.totalorder %s13, 3
    %p201 = pnand %p199, %p200
    %p202 = pneg %p201
    // Predicated region
    $region9: #{inner_model_forward.1} parent=5 // pred_check
      _
    $region10: #{inner_model_forward.1} parent=5 // pred_check_branch
      %204 = sbr.rel (%p201) target = $region12
    $region11: #{inner_model_forward.1} parent=5 // pred_region
      %s205 = ssub.s32 %s13, 1
      // Predicated region
      $region13: #{inner_model_forward.1} parent=11 // pred_check
        %p206 = pneg %p60
      $region14: #{inner_model_forward.1} parent=11 // pred_check_branch
        %208 = sbr.rel (%p206) target = $region16
      $region15: #{inner_model_forward.1} parent=11 // pred_region
        _
      $region16: #{inner_model_forward.1} parent=11 // pred_fallthru
        _
      // Predicated region
      $region17: #{inner_model_forward.1} parent=11 // pred_check
        %p209 = pneg %p81
      $region18: #{inner_model_forward.1} parent=11 // pred_check_branch
        %211 = sbr.rel (%p209) target = $region20
      $region19: #{inner_model_forward.1} parent=11 // pred_region
        _
      $region20: #{inner_model_forward.1} parent=11 // pred_fallthru
        _
      // Predicated region
      $region21: #{inner_model_forward.1} parent=11 // pred_check
        %p212 = pneg %p102
      $region22: #{inner_model_forward.1} parent=11 // pred_check_branch
        %214 = sbr.rel (%p212) target = $region24
      $region23: #{inner_model_forward.1} parent=11 // pred_region
        _
      $region24: #{inner_model_forward.1} parent=11 // pred_fallthru
        _
      // Predicated region
      $region25: #{inner_model_forward.1} parent=11 // pred_check
        %p215 = pneg %p123
      $region26: #{inner_model_forward.1} parent=11 // pred_check_branch
        %217 = sbr.rel (%p215) target = $region28
      $region27: #{inner_model_forward.1} parent=11 // pred_region
        _
      $region28: #{inner_model_forward.1} parent=11 // pred_fallthru
        _
      // Predicated region
      $region29: #{inner_model_forward.1} parent=11 // pred_check
        %p218 = pneg %p144
      $region30: #{inner_model_forward.1} parent=11 // pred_check_branch
        %220 = sbr.rel (%p218) target = $region32
      $region31: #{inner_model_forward.1} parent=11 // pred_region
        _
      $region32: #{inner_model_forward.1} parent=11 // pred_fallthru
        _
      // Predicated region
      $region33: #{inner_model_forward.1} parent=11 // pred_check
        %p221 = pneg %p165
      $region34: #{inner_model_forward.1} parent=11 // pred_check_branch
        %223 = sbr.rel (%p221) target = $region36
      $region35: #{inner_model_forward.1} parent=11 // pred_region
        _
      $region36: #{inner_model_forward.1} parent=11 // pred_fallthru
        _
    $region12: #{inner_model_forward.1} parent=5 // pred_fallthru
      _
    %p224 = scmp.lt.s32.totalorder %s13, 2
    // Predicated region
    $region37: #{inner_model_forward.1} parent=5 // pred_check
      %p225 = pneg %p224
    $region38: #{inner_model_forward.1} parent=5 // pred_check_branch
      %227 = sbr.rel (%p225) target = $region40
    $region39: #{inner_model_forward.1} parent=5 // pred_region
      // Predicated region
      $region41: #{inner_model_forward.1} parent=39 // pred_check
        %p228 = pneg %p33
      $region42: #{inner_model_forward.1} parent=39 // pred_check_branch
        %230 = sbr.rel (%p228) target = $region44
      $region43: #{inner_model_forward.1} parent=39 // pred_region
        %s231 = smul.u32 4, %s13
        %p232 = scmp.lt.s32.totalorder %s231, 7
        %s233 = scalar_select %p232, %s231, 7
        %s234 = smul.addr %s233, 8
        %s235 = scalar_lea.vmem %s0, %s234
        %s236 = smul.u32 4, %s13
      $region44: #{inner_model_forward.1} parent=39 // pred_fallthru
        _
    $region40: #{inner_model_forward.1} parent=5 // pred_fallthru
      _
    %p237 = scmp.le.s32.totalorder 1, %s13
    %p238 = scmp.lt.s32.totalorder %s13, 3
    %p239 = pnand %p237, %p238
    %p240 = pneg %p239
    // Predicated region
    $region45: #{inner_model_forward.1} parent=5 // pred_check
      _
    $region46: #{inner_model_forward.1} parent=5 // pred_check_branch
      %242 = sbr.rel (%p239) target = $region48
    $region47: #{inner_model_forward.1} parent=5 // pred_region
      %s243 = ssub.s32 %s13, 1
      %s244 = smul.u32 4, %s18
      %p245 = scmp.lt.s32.totalorder %s244, 7
      %s246 = scalar_select %p245, %s244, 7
      %s247 = smul.addr %s246, 8
      %s248 = scalar_lea.vmem %s0, %s247
      %p249 = pneg %p39
      %p250 = pneg %p36
      %p251 = pneg %p60
      %p252 = pneg %p57
      %p253 = pneg %p81
      %p254 = pneg %p78
      %p255 = pneg %p102
      %p256 = pneg %p99
      %p257 = pneg %p123
      %p258 = pneg %p120
      %p259 = pneg %p144
      %p260 = pneg %p141
      %p261 = pneg %p165
      %p262 = pneg %p162
      %p263 = pneg %p191
      %p264 = pneg %p188
      %s265 = smul.u32 4, %s18
      %p266 = scmp.lt.s32.totalorder %s265, 7
      %s267 = scalar_select %p266, %s265, 7
      %s268 = smul.addr %s267, 8
      %s269 = scalar_lea.vmem %s7, %s268
      %s270 = smul.u32 4, %s18
      %p271 = scmp.lt.s32.totalorder %s270, 7
      %s272 = scalar_select %p271, %s270, 7
      %s273 = smul.addr %s272, 8
      %s274 = scalar_lea.vmem %s0, %s273
      %s275 = smul.u32 4, %s18
      %s276 = smul.u32 4, %s18
      %p277 = scmp.lt.s32.totalorder %s276, 7
      %s278 = scalar_select %p277, %s276, 7
      %s279 = smul.addr %s278, 8
      %s280 = scalar_lea.vmem %s7, %s279
      %s281 = smul.u32 4, %s18
      %v283 = vld [vmem:[%s1] sm:$0xf]
      %v284 = vld [vmem:[%s1 + $0x4] sm:$0xf]
      %v285 = vld [vmem:[%s1 + $0x8] sm:$0xf]
      %v286 = vld [vmem:[%s1 + $0xc] sm:$0xf]
      %v287 = vld [vmem:[%s2] sm:$0x1]
      %v288 = vld [vmem:[%s3] sm:$0xf]
      %v289 = vld [vmem:[%s3 + $0x4] sm:$0xf]
      %v290 = vld [vmem:[%s3 + $0x8] sm:$0xf]
      %v291 = vld [vmem:[%s3 + $0xc] sm:$0xf]
      %v292 = vld [vmem:[%s3 + $0x10] sm:$0xf]
      %v293 = vld [vmem:[%s3 + $0x14] sm:$0xf]
      %v294 = vld [vmem:[%s3 + $0x18] sm:$0xf]
      %v295 = vld [vmem:[%s3 + $0x1c] sm:$0xf]
      %v296 = vld [vmem:[%s3 + $0x20] sm:$0xf]
      %v297 = vld [vmem:[%s3 + $0x24] sm:$0xf]
      %v298 = vld [vmem:[%s3 + $0x28] sm:$0xf]
      %v299 = vld [vmem:[%s3 + $0x2c] sm:$0xf]
      %v300 = vld [vmem:[%s3 + $0x30] sm:$0xf]
      %v301 = vld [vmem:[%s3 + $0x34] sm:$0xf]
      %v302 = vld [vmem:[%s3 + $0x38] sm:$0xf]
      %v303 = vld [vmem:[%s3 + $0x3c] sm:$0xf]
      %v304 = vld [vmem:[%s4] sm:$0x1]
      %v305 = vld [vmem:[%s5] sm:$0xf]
      %v306 = vld [vmem:[%s5 + $0x4] sm:$0xf]
      %v307 = vld [vmem:[%s5 + $0x8] sm:$0xf]
      %v308 = vld [vmem:[%s5 + $0xc] sm:$0xf]
      %v309 = vld [vmem:[%s5 + $0x10] sm:$0xf]
      %v310 = vld [vmem:[%s5 + $0x14] sm:$0xf]
      %v311 = vld [vmem:[%s5 + $0x18] sm:$0xf]
      %v312 = vld [vmem:[%s5 + $0x1c] sm:$0xf]
      %v313 = vld [vmem:[%s5 + $0x20] sm:$0xf]
      %v314 = vld [vmem:[%s5 + $0x24] sm:$0xf]
      %v315 = vld [vmem:[%s5 + $0x28] sm:$0xf]
      %v316 = vld [vmem:[%s5 + $0x2c] sm:$0xf]
      %v317 = vld [vmem:[%s5 + $0x30] sm:$0xf]
      %v318 = vld [vmem:[%s5 + $0x34] sm:$0xf]
      %v319 = vld [vmem:[%s5 + $0x38] sm:$0xf]
      %v320 = vld [vmem:[%s5 + $0x3c] sm:$0xf]
      %v321 = vld [vmem:[%s6] sm:$0x1]
      %v322 = vld [vmem:[%s274] sm:$0xff]
      %v323 = vld [vmem:[%s274 + $0x8] sm:$0xff]
      %v324 = vld [vmem:[%s274 + $0x10] sm:$0xff]
      %v325 = vld [vmem:[%s274 + $0x18] sm:$0xff]
      %v326 = vpack.c.bf16 %v323, %v322
      %v327 = vpack.c.bf16 %v325, %v324
      %v329 = vperm.slane %v287, 0
      %v335 = vunpack.c.l.b16 %v283
      %v336 = vunpack.c.l.b16 %v284
      %v337 = vunpack.c.l.b16 %v285
      %v338 = vunpack.c.l.b16 %v286
      %v339 = vpack.c.b16 %v336, %v335
      %v340 = vpack.c.b16 %v338, %v337
      %vm343 = vcmask 261120
      %v345 = vsel %vm343, %v326, 0
      %v348 = vsel %vm343, %v327, 0
      %350 = vmatpush.bf16.msra.mxu0 0
      %351 = vmatpush.bf16.msra.mxu0 0
      %352 = vmatpush.bf16.msra.mxu0 0
      %353 = vmatpush.bf16.msra.mxu0 0
      %354 = vmatpush.bf16.msra.mxu0 0
      %355 = vmatpush.bf16.msra.mxu0 0
      %356 = vmatpush.bf16.msra.mxu0 %v340
      %357 = vmatpush.bf16.msra.mxu0 %v339
      %358 = vmatmul.bf16.gmra.mxu0 %v345
      %v359 = vpop.f32.mrf.mxu0
      %v360 = vadd.f32 %v329, %v359
      %v361 = vpop.f32.mrf.mxu0
      %v362 = vadd.f32 %v329, %v361
      %363 = vmatmul.bf16.gmra.mxu0 %v348
      %v364 = vpop.f32.mrf.mxu0
      %v365 = vadd.f32 %v329, %v364
      %v366 = vpop.f32.mrf.mxu0
      %v367 = vadd.f32 %v329, %v366
      %368 = vdwg.mxu0
      %v369 = vmax.f32 %v360, 0.0
      %v370 = vmax.f32 %v362, 0.0
      %v371 = vmax.f32 %v365, 0.0
      %v372 = vmax.f32 %v367, 0.0
      %v373 = vpack.c.bf16 %v370, %v369
      %v374 = vpack.c.bf16 %v372, %v371
      %v376 = vperm.slane %v304, 0
      %v394 = vunpack.c.l.b16 %v288
      %v395 = vunpack.c.l.b16 %v289
      %v396 = vunpack.c.l.b16 %v290
      %v397 = vunpack.c.l.b16 %v291
      %v398 = vunpack.c.l.b16 %v292
      %v399 = vunpack.c.l.b16 %v293
      %v400 = vunpack.c.l.b16 %v294
      %v401 = vunpack.c.l.b16 %v295
      %v402 = vunpack.c.l.b16 %v296
      %v403 = vunpack.c.l.b16 %v297
      %v404 = vunpack.c.l.b16 %v298
      %v405 = vunpack.c.l.b16 %v299
      %v406 = vunpack.c.l.b16 %v300
      %v407 = vunpack.c.l.b16 %v301
      %v408 = vunpack.c.l.b16 %v302
      %v409 = vunpack.c.l.b16 %v303
      %v410 = vpack.c.b16 %v395, %v394
      %v411 = vpack.c.b16 %v397, %v396
      %v412 = vpack.c.b16 %v399, %v398
      %v413 = vpack.c.b16 %v401, %v400
      %v414 = vpack.c.b16 %v403, %v402
      %v415 = vpack.c.b16 %v405, %v404
      %v416 = vpack.c.b16 %v407, %v406
      %v417 = vpack.c.b16 %v409, %v408
      %426 = vmatpush.bf16.msra.mxu0 %v417
      %427 = vmatpush.bf16.msra.mxu0 %v416
      %428 = vmatpush.bf16.msra.mxu0 %v415
      %429 = vmatpush.bf16.msra.mxu0 %v414
      %430 = vmatpush.bf16.msra.mxu0 %v413
      %431 = vmatpush.bf16.msra.mxu0 %v412
      %432 = vmatpush.bf16.msra.mxu0 %v411
      %433 = vmatpush.bf16.msra.mxu0 %v410
      %434 = vmatmul.bf16.gmra.mxu0 %v373
      %v435 = vpop.f32.mrf.mxu0
      %v436 = vadd.f32 %v376, %v435
      %v437 = vpop.f32.mrf.mxu0
      %v438 = vadd.f32 %v376, %v437
      %439 = vmatmul.bf16.gmra.mxu0 %v374
      %v440 = vpop.f32.mrf.mxu0
      %v441 = vadd.f32 %v376, %v440
      %v442 = vpop.f32.mrf.mxu0
      %v443 = vadd.f32 %v376, %v442
      %444 = vdwg.mxu0
      %v445 = vmax.f32 %v436, 0.0
      %v446 = vmax.f32 %v438, 0.0
      %v447 = vmax.f32 %v441, 0.0
      %v448 = vmax.f32 %v443, 0.0
      %v449 = vpack.c.bf16 %v446, %v445
      %v450 = vpack.c.bf16 %v448, %v447
      %v452 = vperm.slane %v321, 0
      %v470 = vunpack.c.l.b16 %v305
      %v471 = vunpack.c.l.b16 %v306
      %v472 = vunpack.c.l.b16 %v307
      %v473 = vunpack.c.l.b16 %v308
      %v474 = vunpack.c.l.b16 %v309
      %v475 = vunpack.c.l.b16 %v310
      %v476 = vunpack.c.l.b16 %v311
      %v477 = vunpack.c.l.b16 %v312
      %v478 = vunpack.c.l.b16 %v313
      %v479 = vunpack.c.l.b16 %v314
      %v480 = vunpack.c.l.b16 %v315
      %v481 = vunpack.c.l.b16 %v316
      %v482 = vunpack.c.l.b16 %v317
      %v483 = vunpack.c.l.b16 %v318
      %v484 = vunpack.c.l.b16 %v319
      %v485 = vunpack.c.l.b16 %v320
      %v486 = vpack.c.b16 %v471, %v470
      %v487 = vpack.c.b16 %v473, %v472
      %v488 = vpack.c.b16 %v475, %v474
      %v489 = vpack.c.b16 %v477, %v476
      %v490 = vpack.c.b16 %v479, %v478
      %v491 = vpack.c.b16 %v481, %v480
      %v492 = vpack.c.b16 %v483, %v482
      %v493 = vpack.c.b16 %v485, %v484
      %502 = vmatpush.bf16.msra.mxu0 %v493
      %503 = vmatpush.bf16.msra.mxu0 %v492
      %504 = vmatpush.bf16.msra.mxu0 %v491
      %505 = vmatpush.bf16.msra.mxu0 %v490
      %506 = vmatpush.bf16.msra.mxu0 %v489
      %507 = vmatpush.bf16.msra.mxu0 %v488
      %508 = vmatpush.bf16.msra.mxu0 %v487
      %509 = vmatpush.bf16.msra.mxu0 %v486
      %510 = vmatmul.bf16.gmra.mxu0 %v449
      %v511 = vpop.f32.mrf.mxu0
      %v512 = vadd.f32 %v452, %v511
      %v513 = vpop.f32.mrf.mxu0
      %v514 = vadd.f32 %v452, %v513
      %515 = vmatmul.bf16.gmra.mxu0 %v450
      %v516 = vpop.f32.mrf.mxu0
      %v517 = vadd.f32 %v452, %v516
      %v518 = vpop.f32.mrf.mxu0
      %v519 = vadd.f32 %v452, %v518
      %520 = vdwg.mxu0
      %v521 = vlaneseq
      %v522 = vand.u32 %v521, 127
      %vm523 = vcmp.eq.s32.totalorder %v522, 1
      %v524 = vmul.f32 %v512, 1.442695
      %v525 = vpow.pop %v524
      %v526 = vmul.f32 %v514, 1.442695
      %v527 = vpow.pop %v526
      %v528 = vmul.f32 %v517, 1.442695
      %v529 = vpow.pop %v528
      %v530 = vmul.f32 %v519, 1.442695
      %v531 = vpow.pop %v530
      %v532 = vsel %vm523, %v525, %v512
      %v533 = vsel %vm523, %v527, %v514
      %v534 = vsel %vm523, %v529, %v517
      %v535 = vsel %vm523, %v531, %v519
      %vm536 = vcmask 64512
      %537 = vst.msk [vmem:[%s280] sm:$0xff] %vm536, %v532
      %538 = vst.msk [vmem:[%s280 + $0x8] sm:$0xff] %vm536, %v533
      %539 = vst.msk [vmem:[%s280 + $0x10] sm:$0xff] %vm536, %v534
      %540 = vst.msk [vmem:[%s280 + $0x18] sm:$0xff] %vm536, %v535
      %s541 = smul.u32 4, %s18
      %p542 = scmp.lt.s32.totalorder %s541, 7
      %s543 = scalar_select %p542, %s541, 7
      %s544 = smul.addr %s543, 8
      %s545 = scalar_lea.vmem %s7, %s544
      // Predicated region
      $region49: #{inner_model_forward.1} parent=47 // pred_check
        %p546 = pneg %p188
      $region50: #{inner_model_forward.1} parent=47 // pred_check_branch
        %548 = sbr.rel (%p546) target = $region52
      $region51: #{inner_model_forward.1} parent=47 // pred_region
        %s549 = smul.u32 4, %s18
      $region52: #{inner_model_forward.1} parent=47 // pred_fallthru
        _
    $region48: #{inner_model_forward.1} parent=5 // pred_fallthru
      _
    %p550 = scmp.le.s32.totalorder 2, %s13
    // Predicated region
    $region53: #{inner_model_forward.1} parent=5 // pred_check
      %p551 = pneg %p550
    $region54: #{inner_model_forward.1} parent=5 // pred_check_branch
      %553 = sbr.rel (%p551) target = $region56
    $region55: #{inner_model_forward.1} parent=5 // pred_region
      %s554 = ssub.s32 %s13, 2
      // Predicated region
      $region57: #{inner_model_forward.1} parent=55 // pred_check
        %p555 = pneg %p194
      $region58: #{inner_model_forward.1} parent=55 // pred_check_branch
        %557 = sbr.rel (%p555) target = $region60
      $region59: #{inner_model_forward.1} parent=55 // pred_region
        %s558 = smul.u32 4, %s19
        %p559 = scmp.lt.s32.totalorder %s558, 7
        %s560 = scalar_select %p559, %s558, 7
        %s561 = smul.addr %s560, 8
        %s562 = scalar_lea.vmem %s7, %s561
      $region60: #{inner_model_forward.1} parent=55 // pred_fallthru
        _
    $region56: #{inner_model_forward.1} parent=5 // pred_fallthru
      _
  $region6: #{inner_model_forward.1} parent=0 // loop_footer
    %s17 = sadd.s32 1, %s13
  $region7: #{inner_model_forward.1} parent=0 // loop_footer_branch
    %12 = sbr.rel target = $region3
  $region8: #{inner_model_forward.1} parent=0 // loop_exit
    _

</llo_original>
